<compile_context>
chip_gen: v7x
topology: tpu7x:2x2x1
jax: 0.10.0
libtpu: 0.0.40
codegen_flags: <defaults>
</compile_context>

<pallas_src>
import math
from functools import partial

import jax
import jax.numpy as jnp
from jax import lax
from jax.experimental import pallas as pl
from jax.experimental.pallas import tpu as pltpu

C_IN, C_OUT, K = 3, 3, 3
LIN_IN, LIN_OUT = 3, 4
LANES = 128


def _fused_kernel(xl_ref, wl_ref, bl_ref, xc_ref, wc_ref, bc_ref,
                  ol_ref, oc_ref, *, batch, width):
    # ---------------- Linear(3, 4) + ReLU (VPU only, no MXU) ----------------
    # xl: (B, 3) ; wl: (3, 128) = W^T zero-padded ; bl: (1, 128) zero-padded.
    xl = xl_ref[...]
    wl = wl_ref[...]
    y = bl_ref[...] + xl[:, 0:1] * wl[0:1, :]
    for k in range(1, LIN_IN):
        y = y + xl[:, k:k + 1] * wl[k:k + 1, :]
    ol_ref[...] = jnp.maximum(y, 0.0).astype(ol_ref.dtype)

    # ---------------- Conv2d(3, 3, 3) + ReLU ----------------
    # xc: (B*C_IN, H*W)  rows ordered (b, ci)      -> 2 vregs at B=2, H=W=16
    # wc: (B*C_IN, K*K*C_OUT) per-tap weight columns: wc[row, t*C_OUT+co]
    #     = conv_w[co, row % C_IN, kh, kw] with t = kh*K + kw   (vreg-resident)
    # bc: (C_OUT,) f32 scalars in SMEM
    # oc: (B*C_OUT, H*W) -- only pixels with h < H-2 and w < W-2 are meaningful.
    x = xc_ref[...]
    w = wc_ref[...]
    rows, hw = x.shape

    # Tap (0, 0): no roll; initialise the per-co accumulators directly (no zeros).
    accs = [x * w[:, co:co + 1] for co in range(C_OUT)]
    for t in range(1, K * K):
        kh, kw = t // K, t % K
        shift = kh * width + kw
        # roll by (hw - shift) == roll by -shift: lane p now holds pixel p + shift,
        # i.e. input pixel (h + kh, w + kw).  One flat roll per tap, shared by all co.
        xs = pltpu.roll(x, hw - shift, axis=1)
        for co in range(C_OUT):
            accs[co] = accs[co] + xs * w[:, t * C_OUT + co: t * C_OUT + co + 1]

    # Reduce the C_IN packed rows of each batch image, add bias, ReLU, store
    # batch-major so the wrapper needs no transpose.
    for co in range(C_OUT):
        a = accs[co]
        b_co = bc_ref[co]                       # hoisted: one SMEM read / splat per co
        for b in range(batch):
            r = b * C_IN
            s = a[r:r + 1, :] + a[r + 1:r + 2, :] + a[r + 2:r + 3, :]   # (1, H*W)
            oc_ref[pl.ds(b * C_OUT + co, 1), :] = jnp.maximum(s + b_co, 0.0).astype(oc_ref.dtype)


def my_module_layers(x_lin, x_conv, lin_w, lin_b, conv_w, conv_b):
    """Runs Linear(3,4)+ReLU and Conv2d(3,3,3)+ReLU (valid, stride 1) fused in one
    Pallas call.  x_lin: (B, 3) ; x_conv: (B, 3, H, W) NCHW (PyTorch convention)."""
    B = x_lin.shape[0]
    Bc, cin, H, W = x_conv.shape
    assert Bc == B and cin == C_IN and H >= K and W >= K
    HW = H * W

    f32 = jnp.float32
    # Linear weights: lane-dense 128-wide so the output store is unmasked.
    wl = jnp.pad(lin_w.T.astype(f32), ((0, 0), (0, LANES - LIN_OUT)))        # (3, 128)
    bl = jnp.pad(lin_b.astype(f32), (0, LANES - LIN_OUT)).reshape(1, LANES)  # (1, 128)

    # Conv input: pure reshape (no pad, no transpose) into (B*C_IN, H*W).
    xc = x_conv.astype(f32).reshape(B * C_IN, HW)

    # Per-tap weight columns aligned to the packed (b, ci) rows:
    #   wc[row, t*C_OUT + co] = conv_w[co, row % C_IN, kh, kw],  t = kh*K + kw
    w_t = jnp.transpose(conv_w.astype(f32), (1, 2, 3, 0)).reshape(C_IN, K * K * C_OUT)
    wc = jnp.tile(w_t, (B, 1))                                               # (B*C_IN, 27)
    bc = conv_b.astype(f32)                                                  # (3,)

    kernel = partial(_fused_kernel, batch=B, width=W)
    out_lin, out_conv = pl.pallas_call(
        kernel,
        out_shape=(
            jax.ShapeDtypeStruct((B, LANES), f32),
            jax.ShapeDtypeStruct((B * C_OUT, HW), f32),
        ),
        in_specs=[
            pl.BlockSpec(memory_space=pltpu.MemorySpace.VMEM),  # x_lin
            pl.BlockSpec(memory_space=pltpu.MemorySpace.VMEM),  # linear W^T (padded)
            pl.BlockSpec(memory_space=pltpu.MemorySpace.VMEM),  # linear bias (padded)
            pl.BlockSpec(memory_space=pltpu.MemorySpace.VMEM),  # x_conv packed (B*C_IN, H*W)
            pl.BlockSpec(memory_space=pltpu.MemorySpace.VMEM),  # conv weight columns (B*C_IN, 27)
            pl.BlockSpec(memory_space=pltpu.MemorySpace.SMEM),  # conv bias (3,)
        ],
        out_specs=(
            pl.BlockSpec(memory_space=pltpu.MemorySpace.VMEM),
            pl.BlockSpec(memory_space=pltpu.MemorySpace.VMEM),
        ),
    )(x_lin.astype(f32), wl, bl, xc, wc, bc)

    Ho, Wo = H - K + 1, W - K + 1
    y_lin = out_lin[:, :LIN_OUT]                                    # (B, 4)
    # Batch-major reshape (no transpose), then drop the wrap-contaminated region.
    y_conv = out_conv.reshape(B, C_OUT, H, W)[:, :, :Ho, :Wo]       # (B, 3, Ho, Wo)
    return y_lin, y_conv


if __name__ == "__main__":
    key = jax.random.PRNGKey(0)
    k_lw, k_lb, k_cw, k_cb, k_xl, k_xc = jax.random.split(key, 6)

    # Deterministic PyTorch-style uniform(-1/sqrt(fan_in), 1/sqrt(fan_in)) init.
    lin_bound = 1.0 / math.sqrt(LIN_IN)
    lin_w = jax.random.uniform(k_lw, (LIN_OUT, LIN_IN), jnp.float32, -lin_bound, lin_bound)
    lin_b = jax.random.uniform(k_lb, (LIN_OUT,), jnp.float32, -lin_bound, lin_bound)

    conv_bound = 1.0 / math.sqrt(C_IN * K * K)
    conv_w = jax.random.uniform(k_cw, (C_OUT, C_IN, K, K), jnp.float32, -conv_bound, conv_bound)
    conv_b = jax.random.uniform(k_cb, (C_OUT,), jnp.float32, -conv_bound, conv_bound)

    # Small example inputs consistent with the declared layers.
    x_lin = jax.random.normal(k_xl, (2, LIN_IN), jnp.float32)           # Linear(3,4) input
    x_conv = jax.random.normal(k_xc, (2, C_IN, 16, 16), jnp.float32)    # Conv2d(3,3,3) input (NCHW)

    y_lin, y_conv = my_module_layers(x_lin, x_conv, lin_w, lin_b, conv_w, conv_b)
    jax.block_until_ready((y_lin, y_conv))

    assert y_lin.shape == (2, LIN_OUT)
    assert y_conv.shape == (2, C_OUT, 14, 14)

    # Pure-JAX references (correctness check).
    ref_lin = jnp.maximum(
        jnp.dot(x_lin, lin_w.T, precision=lax.Precision.HIGHEST) + lin_b, 0.0)
    ref_conv = jnp.maximum(
        lax.conv_general_dilated(
            x_conv, conv_w, (1, 1), "VALID",
            dimension_numbers=("NCHW", "OIHW", "NCHW"),
            precision=lax.Precision.HIGHEST,
        ) + conv_b[None, :, None, None],
        0.0,
    )
    assert float(jnp.max(jnp.abs(y_lin - ref_lin))) < 1e-4
    assert float(jnp.max(jnp.abs(y_conv - ref_conv))) < 1e-4

    print("KERNEL_OK")
</pallas_src>

<mosaic_0001>
module attributes {stable_mosaic.version = 11 : i64} {
  func.func @_fused_kernel(%arg0: memref<2x3xf32, #tpu.memory_space<vmem>>, %arg1: memref<3x128xf32, #tpu.memory_space<vmem>>, %arg2: memref<1x128xf32, #tpu.memory_space<vmem>>, %arg3: memref<6x256xf32, #tpu.memory_space<vmem>>, %arg4: memref<6x27xf32, #tpu.memory_space<vmem>>, %arg5: memref<3xf32, #tpu.memory_space<smem>>, %arg6: memref<2x128xf32, #tpu.memory_space<vmem>>, %arg7: memref<6x256xf32, #tpu.memory_space<vmem>>) attributes {dimension_semantics = [], scalar_prefetch = 0 : i64, scratch_operands = 0 : i64, tpu.core_type = #tpu.core_type<tc>} {
    %c0 = arith.constant 0 : index
    %c0_0 = arith.constant 0 : index
    %0 = vector.load %arg0[%c0, %c0_0] : memref<2x3xf32, #tpu.memory_space<vmem>>, vector<2x3xf32>
    %c0_1 = arith.constant 0 : index
    %c0_2 = arith.constant 0 : index
    %1 = vector.load %arg1[%c0_1, %c0_2] : memref<3x128xf32, #tpu.memory_space<vmem>>, vector<3x128xf32>
    %c0_3 = arith.constant 0 : index
    %c0_4 = arith.constant 0 : index
    %2 = vector.load %arg2[%c0_3, %c0_4] : memref<1x128xf32, #tpu.memory_space<vmem>>, vector<1x128xf32>
    %3 = vector.extract_strided_slice %0 {offsets = [0, 0], sizes = [2, 1], strides = [1, 1]} : vector<2x3xf32> to vector<2x1xf32>
    %4 = vector.extract_strided_slice %1 {offsets = [0, 0], sizes = [1, 128], strides = [1, 1]} : vector<3x128xf32> to vector<1x128xf32>
    %5 = vector.broadcast %3 : vector<2x1xf32> to vector<2x128xf32>
    %6 = vector.broadcast %4 : vector<1x128xf32> to vector<2x128xf32>
    %7 = arith.mulf %5, %6 : vector<2x128xf32>
    %8 = vector.broadcast %2 : vector<1x128xf32> to vector<2x128xf32>
    %9 = arith.addf %8, %7 : vector<2x128xf32>
    %10 = vector.extract_strided_slice %0 {offsets = [0, 1], sizes = [2, 1], strides = [1, 1]} : vector<2x3xf32> to vector<2x1xf32>
    %11 = vector.extract_strided_slice %1 {offsets = [1, 0], sizes = [1, 128], strides = [1, 1]} : vector<3x128xf32> to vector<1x128xf32>
    %12 = vector.broadcast %10 : vector<2x1xf32> to vector<2x128xf32>
    %13 = vector.broadcast %11 : vector<1x128xf32> to vector<2x128xf32>
    %14 = arith.mulf %12, %13 : vector<2x128xf32>
    %15 = arith.addf %9, %14 : vector<2x128xf32>
    %16 = vector.extract_strided_slice %0 {offsets = [0, 2], sizes = [2, 1], strides = [1, 1]} : vector<2x3xf32> to vector<2x1xf32>
    %17 = vector.extract_strided_slice %1 {offsets = [2, 0], sizes = [1, 128], strides = [1, 1]} : vector<3x128xf32> to vector<1x128xf32>
    %18 = vector.broadcast %16 : vector<2x1xf32> to vector<2x128xf32>
    %19 = vector.broadcast %17 : vector<1x128xf32> to vector<2x128xf32>
    %20 = arith.mulf %18, %19 : vector<2x128xf32>
    %21 = arith.addf %15, %20 : vector<2x128xf32>
    %cst = arith.constant 0.000000e+00 : f32
    %22 = vector.broadcast %cst : f32 to vector<2x128xf32>
    %23 = arith.maximumf %21, %22 : vector<2x128xf32>
    %c0_5 = arith.constant 0 : index
    %c0_6 = arith.constant 0 : index
    %24 = vector.load %arg6[%c0_5, %c0_6] : memref<2x128xf32, #tpu.memory_space<vmem>>, vector<2x128xf32>
    tpu.vector_store %arg6[%c0_5, %c0_6], %23 {strides = array<i32>} : memref<2x128xf32, #tpu.memory_space<vmem>>, vector<2x128xf32>,
    %c0_7 = arith.constant 0 : index
    %c0_8 = arith.constant 0 : index
    %25 = vector.load %arg3[%c0_7, %c0_8] : memref<6x256xf32, #tpu.memory_space<vmem>>, vector<6x256xf32>
    %c0_9 = arith.constant 0 : index
    %c0_10 = arith.constant 0 : index
    %26 = vector.load %arg4[%c0_9, %c0_10] : memref<6x27xf32, #tpu.memory_space<vmem>>, vector<6x27xf32>
    %27 = vector.extract_strided_slice %26 {offsets = [0, 0], sizes = [6, 1], strides = [1, 1]} : vector<6x27xf32> to vector<6x1xf32>
    %28 = vector.broadcast %27 : vector<6x1xf32> to vector<6x256xf32>
    %29 = arith.mulf %25, %28 : vector<6x256xf32>
    %30 = vector.extract_strided_slice %26 {offsets = [0, 1], sizes = [6, 1], strides = [1, 1]} : vector<6x27xf32> to vector<6x1xf32>
    %31 = vector.broadcast %30 : vector<6x1xf32> to vector<6x256xf32>
    %32 = arith.mulf %25, %31 : vector<6x256xf32>
    %33 = vector.extract_strided_slice %26 {offsets = [0, 2], sizes = [6, 1], strides = [1, 1]} : vector<6x27xf32> to vector<6x1xf32>
    %34 = vector.broadcast %33 : vector<6x1xf32> to vector<6x256xf32>
    %35 = arith.mulf %25, %34 : vector<6x256xf32>
    %c255_i32 = arith.constant 255 : i32
    %36 = tpu.dynamic_rotate %25 by %c255_i32 dim 1 : vector<6x256xf32>, i32 -> vector<6x256xf32>
    %37 = vector.extract_strided_slice %26 {offsets = [0, 3], sizes = [6, 1], strides = [1, 1]} : vector<6x27xf32> to vector<6x1xf32>
    %38 = vector.broadcast %37 : vector<6x1xf32> to vector<6x256xf32>
    %39 = arith.mulf %36, %38 : vector<6x256xf32>
    %40 = arith.addf %29, %39 : vector<6x256xf32>
    %41 = vector.extract_strided_slice %26 {offsets = [0, 4], sizes = [6, 1], strides = [1, 1]} : vector<6x27xf32> to vector<6x1xf32>
    %42 = vector.broadcast %41 : vector<6x1xf32> to vector<6x256xf32>
    %43 = arith.mulf %36, %42 : vector<6x256xf32>
    %44 = arith.addf %32, %43 : vector<6x256xf32>
    %45 = vector.extract_strided_slice %26 {offsets = [0, 5], sizes = [6, 1], strides = [1, 1]} : vector<6x27xf32> to vector<6x1xf32>
    %46 = vector.broadcast %45 : vector<6x1xf32> to vector<6x256xf32>
    %47 = arith.mulf %36, %46 : vector<6x256xf32>
    %48 = arith.addf %35, %47 : vector<6x256xf32>
    %c254_i32 = arith.constant 254 : i32
    %49 = tpu.dynamic_rotate %25 by %c254_i32 dim 1 : vector<6x256xf32>, i32 -> vector<6x256xf32>
    %50 = vector.extract_strided_slice %26 {offsets = [0, 6], sizes = [6, 1], strides = [1, 1]} : vector<6x27xf32> to vector<6x1xf32>
    %51 = vector.broadcast %50 : vector<6x1xf32> to vector<6x256xf32>
    %52 = arith.mulf %49, %51 : vector<6x256xf32>
    %53 = arith.addf %40, %52 : vector<6x256xf32>
    %54 = vector.extract_strided_slice %26 {offsets = [0, 7], sizes = [6, 1], strides = [1, 1]} : vector<6x27xf32> to vector<6x1xf32>
    %55 = vector.broadcast %54 : vector<6x1xf32> to vector<6x256xf32>
    %56 = arith.mulf %49, %55 : vector<6x256xf32>
    %57 = arith.addf %44, %56 : vector<6x256xf32>
    %58 = vector.extract_strided_slice %26 {offsets = [0, 8], sizes = [6, 1], strides = [1, 1]} : vector<6x27xf32> to vector<6x1xf32>
    %59 = vector.broadcast %58 : vector<6x1xf32> to vector<6x256xf32>
    %60 = arith.mulf %49, %59 : vector<6x256xf32>
    %61 = arith.addf %48, %60 : vector<6x256xf32>
    %c240_i32 = arith.constant 240 : i32
    %62 = tpu.dynamic_rotate %25 by %c240_i32 dim 1 : vector<6x256xf32>, i32 -> vector<6x256xf32>
    %63 = vector.extract_strided_slice %26 {offsets = [0, 9], sizes = [6, 1], strides = [1, 1]} : vector<6x27xf32> to vector<6x1xf32>
    %64 = vector.broadcast %63 : vector<6x1xf32> to vector<6x256xf32>
    %65 = arith.mulf %62, %64 : vector<6x256xf32>
    %66 = arith.addf %53, %65 : vector<6x256xf32>
    %67 = vector.extract_strided_slice %26 {offsets = [0, 10], sizes = [6, 1], strides = [1, 1]} : vector<6x27xf32> to vector<6x1xf32>
    %68 = vector.broadcast %67 : vector<6x1xf32> to vector<6x256xf32>
    %69 = arith.mulf %62, %68 : vector<6x256xf32>
    %70 = arith.addf %57, %69 : vector<6x256xf32>
    %71 = vector.extract_strided_slice %26 {offsets = [0, 11], sizes = [6, 1], strides = [1, 1]} : vector<6x27xf32> to vector<6x1xf32>
    %72 = vector.broadcast %71 : vector<6x1xf32> to vector<6x256xf32>
    %73 = arith.mulf %62, %72 : vector<6x256xf32>
    %74 = arith.addf %61, %73 : vector<6x256xf32>
    %c239_i32 = arith.constant 239 : i32
    %75 = tpu.dynamic_rotate %25 by %c239_i32 dim 1 : vector<6x256xf32>, i32 -> vector<6x256xf32>
    %76 = vector.extract_strided_slice %26 {offsets = [0, 12], sizes = [6, 1], strides = [1, 1]} : vector<6x27xf32> to vector<6x1xf32>
    %77 = vector.broadcast %76 : vector<6x1xf32> to vector<6x256xf32>
    %78 = arith.mulf %75, %77 : vector<6x256xf32>
    %79 = arith.addf %66, %78 : vector<6x256xf32>
    %80 = vector.extract_strided_slice %26 {offsets = [0, 13], sizes = [6, 1], strides = [1, 1]} : vector<6x27xf32> to vector<6x1xf32>
    %81 = vector.broadcast %80 : vector<6x1xf32> to vector<6x256xf32>
    %82 = arith.mulf %75, %81 : vector<6x256xf32>
    %83 = arith.addf %70, %82 : vector<6x256xf32>
    %84 = vector.extract_strided_slice %26 {offsets = [0, 14], sizes = [6, 1], strides = [1, 1]} : vector<6x27xf32> to vector<6x1xf32>
    %85 = vector.broadcast %84 : vector<6x1xf32> to vector<6x256xf32>
    %86 = arith.mulf %75, %85 : vector<6x256xf32>
    %87 = arith.addf %74, %86 : vector<6x256xf32>
    %c238_i32 = arith.constant 238 : i32
    %88 = tpu.dynamic_rotate %25 by %c238_i32 dim 1 : vector<6x256xf32>, i32 -> vector<6x256xf32>
    %89 = vector.extract_strided_slice %26 {offsets = [0, 15], sizes = [6, 1], strides = [1, 1]} : vector<6x27xf32> to vector<6x1xf32>
    %90 = vector.broadcast %89 : vector<6x1xf32> to vector<6x256xf32>
    %91 = arith.mulf %88, %90 : vector<6x256xf32>
    %92 = arith.addf %79, %91 : vector<6x256xf32>
    %93 = vector.extract_strided_slice %26 {offsets = [0, 16], sizes = [6, 1], strides = [1, 1]} : vector<6x27xf32> to vector<6x1xf32>
    %94 = vector.broadcast %93 : vector<6x1xf32> to vector<6x256xf32>
    %95 = arith.mulf %88, %94 : vector<6x256xf32>
    %96 = arith.addf %83, %95 : vector<6x256xf32>
    %97 = vector.extract_strided_slice %26 {offsets = [0, 17], sizes = [6, 1], strides = [1, 1]} : vector<6x27xf32> to vector<6x1xf32>
    %98 = vector.broadcast %97 : vector<6x1xf32> to vector<6x256xf32>
    %99 = arith.mulf %88, %98 : vector<6x256xf32>
    %100 = arith.addf %87, %99 : vector<6x256xf32>
    %c224_i32 = arith.constant 224 : i32
    %101 = tpu.dynamic_rotate %25 by %c224_i32 dim 1 : vector<6x256xf32>, i32 -> vector<6x256xf32>
    %102 = vector.extract_strided_slice %26 {offsets = [0, 18], sizes = [6, 1], strides = [1, 1]} : vector<6x27xf32> to vector<6x1xf32>
    %103 = vector.broadcast %102 : vector<6x1xf32> to vector<6x256xf32>
    %104 = arith.mulf %101, %103 : vector<6x256xf32>
    %105 = arith.addf %92, %104 : vector<6x256xf32>
    %106 = vector.extract_strided_slice %26 {offsets = [0, 19], sizes = [6, 1], strides = [1, 1]} : vector<6x27xf32> to vector<6x1xf32>
    %107 = vector.broadcast %106 : vector<6x1xf32> to vector<6x256xf32>
    %108 = arith.mulf %101, %107 : vector<6x256xf32>
    %109 = arith.addf %96, %108 : vector<6x256xf32>
    %110 = vector.extract_strided_slice %26 {offsets = [0, 20], sizes = [6, 1], strides = [1, 1]} : vector<6x27xf32> to vector<6x1xf32>
    %111 = vector.broadcast %110 : vector<6x1xf32> to vector<6x256xf32>
    %112 = arith.mulf %101, %111 : vector<6x256xf32>
    %113 = arith.addf %100, %112 : vector<6x256xf32>
    %c223_i32 = arith.constant 223 : i32
    %114 = tpu.dynamic_rotate %25 by %c223_i32 dim 1 : vector<6x256xf32>, i32 -> vector<6x256xf32>
    %115 = vector.extract_strided_slice %26 {offsets = [0, 21], sizes = [6, 1], strides = [1, 1]} : vector<6x27xf32> to vector<6x1xf32>
    %116 = vector.broadcast %115 : vector<6x1xf32> to vector<6x256xf32>
    %117 = arith.mulf %114, %116 : vector<6x256xf32>
    %118 = arith.addf %105, %117 : vector<6x256xf32>
    %119 = vector.extract_strided_slice %26 {offsets = [0, 22], sizes = [6, 1], strides = [1, 1]} : vector<6x27xf32> to vector<6x1xf32>
    %120 = vector.broadcast %119 : vector<6x1xf32> to vector<6x256xf32>
    %121 = arith.mulf %114, %120 : vector<6x256xf32>
    %122 = arith.addf %109, %121 : vector<6x256xf32>
    %123 = vector.extract_strided_slice %26 {offsets = [0, 23], sizes = [6, 1], strides = [1, 1]} : vector<6x27xf32> to vector<6x1xf32>
    %124 = vector.broadcast %123 : vector<6x1xf32> to vector<6x256xf32>
    %125 = arith.mulf %114, %124 : vector<6x256xf32>
    %126 = arith.addf %113, %125 : vector<6x256xf32>
    %c222_i32 = arith.constant 222 : i32
    %127 = tpu.dynamic_rotate %25 by %c222_i32 dim 1 : vector<6x256xf32>, i32 -> vector<6x256xf32>
    %128 = vector.extract_strided_slice %26 {offsets = [0, 24], sizes = [6, 1], strides = [1, 1]} : vector<6x27xf32> to vector<6x1xf32>
    %129 = vector.broadcast %128 : vector<6x1xf32> to vector<6x256xf32>
    %130 = arith.mulf %127, %129 : vector<6x256xf32>
    %131 = arith.addf %118, %130 : vector<6x256xf32>
    %132 = vector.extract_strided_slice %26 {offsets = [0, 25], sizes = [6, 1], strides = [1, 1]} : vector<6x27xf32> to vector<6x1xf32>
    %133 = vector.broadcast %132 : vector<6x1xf32> to vector<6x256xf32>
    %134 = arith.mulf %127, %133 : vector<6x256xf32>
    %135 = arith.addf %122, %134 : vector<6x256xf32>
    %136 = vector.extract_strided_slice %26 {offsets = [0, 26], sizes = [6, 1], strides = [1, 1]} : vector<6x27xf32> to vector<6x1xf32>
    %137 = vector.broadcast %136 : vector<6x1xf32> to vector<6x256xf32>
    %138 = arith.mulf %127, %137 : vector<6x256xf32>
    %139 = arith.addf %126, %138 : vector<6x256xf32>
    %c0_11 = arith.constant 0 : index
    %140 = memref.load %arg5[%c0_11] : memref<3xf32, #tpu.memory_space<smem>>
    %141 = vector.extract_strided_slice %131 {offsets = [0, 0], sizes = [1, 256], strides = [1, 1]} : vector<6x256xf32> to vector<1x256xf32>
    %142 = vector.extract_strided_slice %131 {offsets = [1, 0], sizes = [1, 256], strides = [1, 1]} : vector<6x256xf32> to vector<1x256xf32>
    %143 = arith.addf %141, %142 : vector<1x256xf32>
    %144 = vector.extract_strided_slice %131 {offsets = [2, 0], sizes = [1, 256], strides = [1, 1]} : vector<6x256xf32> to vector<1x256xf32>
    %145 = arith.addf %143, %144 : vector<1x256xf32>
    %146 = vector.broadcast %140 : f32 to vector<1x256xf32>
    %147 = arith.addf %145, %146 : vector<1x256xf32>
    %cst_12 = arith.constant 0.000000e+00 : f32
    %148 = vector.broadcast %cst_12 : f32 to vector<1x256xf32>
    %149 = arith.maximumf %147, %148 : vector<1x256xf32>
    %c0_13 = arith.constant 0 : index
    %c0_14 = arith.constant 0 : index
    %150 = vector.load %arg7[%c0_13, %c0_14] : memref<6x256xf32, #tpu.memory_space<vmem>>, vector<1x256xf32>
    tpu.vector_store %arg7[%c0_13, %c0_14], %149 {strides = array<i32>} : memref<6x256xf32, #tpu.memory_space<vmem>>, vector<1x256xf32>,
    %151 = vector.extract_strided_slice %131 {offsets = [3, 0], sizes = [1, 256], strides = [1, 1]} : vector<6x256xf32> to vector<1x256xf32>
    %152 = vector.extract_strided_slice %131 {offsets = [4, 0], sizes = [1, 256], strides = [1, 1]} : vector<6x256xf32> to vector<1x256xf32>
    %153 = arith.addf %151, %152 : vector<1x256xf32>
    %154 = vector.extract_strided_slice %131 {offsets = [5, 0], sizes = [1, 256], strides = [1, 1]} : vector<6x256xf32> to vector<1x256xf32>
    %155 = arith.addf %153, %154 : vector<1x256xf32>
    %156 = vector.broadcast %140 : f32 to vector<1x256xf32>
    %157 = arith.addf %155, %156 : vector<1x256xf32>
    %cst_15 = arith.constant 0.000000e+00 : f32
    %158 = vector.broadcast %cst_15 : f32 to vector<1x256xf32>
    %159 = arith.maximumf %157, %158 : vector<1x256xf32>
    %c3 = arith.constant 3 : index
    %c0_16 = arith.constant 0 : index
    %160 = vector.load %arg7[%c3, %c0_16] : memref<6x256xf32, #tpu.memory_space<vmem>>, vector<1x256xf32>
    tpu.vector_store %arg7[%c3, %c0_16], %159 {strides = array<i32>} : memref<6x256xf32, #tpu.memory_space<vmem>>, vector<1x256xf32>,
    %c1 = arith.constant 1 : index
    %161 = memref.load %arg5[%c1] : memref<3xf32, #tpu.memory_space<smem>>
    %162 = vector.extract_strided_slice %135 {offsets = [0, 0], sizes = [1, 256], strides = [1, 1]} : vector<6x256xf32> to vector<1x256xf32>
    %163 = vector.extract_strided_slice %135 {offsets = [1, 0], sizes = [1, 256], strides = [1, 1]} : vector<6x256xf32> to vector<1x256xf32>
    %164 = arith.addf %162, %163 : vector<1x256xf32>
    %165 = vector.extract_strided_slice %135 {offsets = [2, 0], sizes = [1, 256], strides = [1, 1]} : vector<6x256xf32> to vector<1x256xf32>
    %166 = arith.addf %164, %165 : vector<1x256xf32>
    %167 = vector.broadcast %161 : f32 to vector<1x256xf32>
    %168 = arith.addf %166, %167 : vector<1x256xf32>
    %cst_17 = arith.constant 0.000000e+00 : f32
    %169 = vector.broadcast %cst_17 : f32 to vector<1x256xf32>
    %170 = arith.maximumf %168, %169 : vector<1x256xf32>
    %c1_18 = arith.constant 1 : index
    %c0_19 = arith.constant 0 : index
    %171 = vector.load %arg7[%c1_18, %c0_19] : memref<6x256xf32, #tpu.memory_space<vmem>>, vector<1x256xf32>
    tpu.vector_store %arg7[%c1_18, %c0_19], %170 {strides = array<i32>} : memref<6x256xf32, #tpu.memory_space<vmem>>, vector<1x256xf32>,
    %172 = vector.extract_strided_slice %135 {offsets = [3, 0], sizes = [1, 256], strides = [1, 1]} : vector<6x256xf32> to vector<1x256xf32>
    %173 = vector.extract_strided_slice %135 {offsets = [4, 0], sizes = [1, 256], strides = [1, 1]} : vector<6x256xf32> to vector<1x256xf32>
    %174 = arith.addf %172, %173 : vector<1x256xf32>
    %175 = vector.extract_strided_slice %135 {offsets = [5, 0], sizes = [1, 256], strides = [1, 1]} : vector<6x256xf32> to vector<1x256xf32>
    %176 = arith.addf %174, %175 : vector<1x256xf32>
    %177 = vector.broadcast %161 : f32 to vector<1x256xf32>
    %178 = arith.addf %176, %177 : vector<1x256xf32>
    %cst_20 = arith.constant 0.000000e+00 : f32
    %179 = vector.broadcast %cst_20 : f32 to vector<1x256xf32>
    %180 = arith.maximumf %178, %179 : vector<1x256xf32>
    %c4 = arith.constant 4 : index
    %c0_21 = arith.constant 0 : index
    %181 = vector.load %arg7[%c4, %c0_21] : memref<6x256xf32, #tpu.memory_space<vmem>>, vector<1x256xf32>
    tpu.vector_store %arg7[%c4, %c0_21], %180 {strides = array<i32>} : memref<6x256xf32, #tpu.memory_space<vmem>>, vector<1x256xf32>,
    %c2 = arith.constant 2 : index
    %182 = memref.load %arg5[%c2] : memref<3xf32, #tpu.memory_space<smem>>
    %183 = vector.extract_strided_slice %139 {offsets = [0, 0], sizes = [1, 256], strides = [1, 1]} : vector<6x256xf32> to vector<1x256xf32>
    %184 = vector.extract_strided_slice %139 {offsets = [1, 0], sizes = [1, 256], strides = [1, 1]} : vector<6x256xf32> to vector<1x256xf32>
    %185 = arith.addf %183, %184 : vector<1x256xf32>
    %186 = vector.extract_strided_slice %139 {offsets = [2, 0], sizes = [1, 256], strides = [1, 1]} : vector<6x256xf32> to vector<1x256xf32>
    %187 = arith.addf %185, %186 : vector<1x256xf32>
    %188 = vector.broadcast %182 : f32 to vector<1x256xf32>
    %189 = arith.addf %187, %188 : vector<1x256xf32>
    %cst_22 = arith.constant 0.000000e+00 : f32
    %190 = vector.broadcast %cst_22 : f32 to vector<1x256xf32>
    %191 = arith.maximumf %189, %190 : vector<1x256xf32>
    %c2_23 = arith.constant 2 : index
    %c0_24 = arith.constant 0 : index
    %192 = vector.load %arg7[%c2_23, %c0_24] : memref<6x256xf32, #tpu.memory_space<vmem>>, vector<1x256xf32>
    tpu.vector_store %arg7[%c2_23, %c0_24], %191 {strides = array<i32>} : memref<6x256xf32, #tpu.memory_space<vmem>>, vector<1x256xf32>,
    %193 = vector.extract_strided_slice %139 {offsets = [3, 0], sizes = [1, 256], strides = [1, 1]} : vector<6x256xf32> to vector<1x256xf32>
    %194 = vector.extract_strided_slice %139 {offsets = [4, 0], sizes = [1, 256], strides = [1, 1]} : vector<6x256xf32> to vector<1x256xf32>
    %195 = arith.addf %193, %194 : vector<1x256xf32>
    %196 = vector.extract_strided_slice %139 {offsets = [5, 0], sizes = [1, 256], strides = [1, 1]} : vector<6x256xf32> to vector<1x256xf32>
    %197 = arith.addf %195, %196 : vector<1x256xf32>
    %198 = vector.broadcast %182 : f32 to vector<1x256xf32>
    %199 = arith.addf %197, %198 : vector<1x256xf32>
    %cst_25 = arith.constant 0.000000e+00 : f32
    %200 = vector.broadcast %cst_25 : f32 to vector<1x256xf32>
    %201 = arith.maximumf %199, %200 : vector<1x256xf32>
    %c5 = arith.constant 5 : index
    %c0_26 = arith.constant 0 : index
    %202 = vector.load %arg7[%c5, %c0_26] : memref<6x256xf32, #tpu.memory_space<vmem>>, vector<1x256xf32>
    tpu.vector_store %arg7[%c5, %c0_26], %201 {strides = array<i32>} : memref<6x256xf32, #tpu.memory_space<vmem>>, vector<1x256xf32>,
    return
  }
}

</mosaic_0001>

<llo_original>
// kernel: tpu_custom_call.1
$region0: #{tpu_custom_call.1}
  #allocation0 [shape = 'u32[]', space=smem, size = 0x4, offset = 0x4, fixed_abs, tag = 'smem constant byte address 0x4 - core index']
  #allocation1 [shape = 'u32[144,128]{1,0:T(1,128)}', space=vmem, size = 0x12000, scoped, tag = 'internal scratch']
  %s0 = inlined_call_operand.hbm [shape: f32[2,3], index: 0, kind: input, shape index: {}]
  %s1 = inlined_call_operand.hbm [shape: f32[3,128], index: 1, kind: input, shape index: {}]
  %s2 = inlined_call_operand.vmem [shape: f32[1,128], index: 2, kind: input, shape index: {}]
  %s3 = inlined_call_operand.hbm [shape: f32[6,256], index: 3, kind: input, shape index: {}]
  %s4 = inlined_call_operand.vmem [shape: f32[6,27], index: 4, kind: input, shape index: {}]
  %s5 = inlined_call_operand.vmem [shape: f32[3], index: 5, kind: input, shape index: {}]
  %s6 = inlined_call_operand.hbm [shape: f32[2,128], index: 6, kind: output, shape index: {0}]
  %s7 = inlined_call_operand.hbm [shape: f32[6,256], index: 7, kind: output, shape index: {1}]
  %8 = xla_tuple %s6, %s7
  %s9 = sld [smem:[#allocation0]]
  $region58: #{tpu_custom_call.1} parent=0
    _
  %s11 = ssub.s32 1, %s9
  %s12 = scalar_select 0, %s11, %s9
  $region1: #{tpu_custom_call.1} parent=0
    #allocation2 [shape = 'u8[1024]{0}', space=vmem, size = 0x400, scoped, tag = 'input window, operand 0, single buffered']
    #allocation3 [shape = 's32[1]{0}', space=sflag, size = 0x4, scoped, tag = 'scoped memory for tpu_custom_call.1']
    #allocation4 [shape = 's32[1]{0}', space=sflag, size = 0x4, scoped, tag = 'scoped memory for tpu_custom_call.1']
    #allocation5 [shape = 's32[1]{0}', space=sflag, size = 0x4, scoped, tag = 'scoped memory for tpu_custom_call.1']
    #allocation6 [shape = 'u8[2048]{0}', space=vmem, size = 0x800, scoped, tag = 'input window, operand 1, single buffered']
    #allocation7 [shape = 's32[1]{0}', space=sflag, size = 0x4, scoped, tag = 'scoped memory for tpu_custom_call.1']
    #allocation8 [shape = 'u8[8192]{0}', space=vmem, size = 0x2000, scoped, tag = 'input window, operand 3, single buffered']
    #allocation9 [shape = 'u8[512]{0}', space=smem, size = 0x200, scoped, tag = 'input window, operand 5, single buffered']
    #allocation10 [shape = 'u8[1024]{0}', space=vmem, size = 0x400, scoped, tag = 'output window, operand 0, single buffered']
    #allocation11 [shape = 'u8[8192]{0}', space=vmem, size = 0x2000, scoped, tag = 'output window, operand 1, single buffered']
    #allocation12 [shape = 's32[1]{0}', space=sflag, size = 0x4, scoped, tag = 'scoped memory for tpu_custom_call.1']
    %13 = vsyncpa [#allocation3], 0
    %14 = vsyncpa [#allocation7], 0
    %15 = vsyncpa [#allocation5], 0
    %16 = vsyncpa [#allocation4], 0
    %17 = vsyncpa [#allocation12], 0
    // Predicated region
    $region2: #{tpu_custom_call.1} parent=1 // pred_check
      _
    $region3: #{tpu_custom_call.1} parent=1 // pred_check_branch
      %19 = sbr.rel (0) target = $region5
    $region4: #{tpu_custom_call.1} parent=1 // pred_region
      %s21 = ssub.s32 32, 32
      %22 = vsyncadd [#allocation3], %s21
      %s24 = sshll.u32 [#allocation2], 4
      %s25 = int_to_ptr.vmem [resolvable:$true] %s24
      %27 = dma.hbm_to_vmem [thread:$0]  %s0, 32, %s25, [#allocation3]
    $region5: #{tpu_custom_call.1} parent=1 // pred_fallthru
      _
    // Predicated region
    $region6: #{tpu_custom_call.1} parent=1 // pred_check
      _
    $region7: #{tpu_custom_call.1} parent=1 // pred_check_branch
      %29 = sbr.rel (0) target = $region9
    $region8: #{tpu_custom_call.1} parent=1 // pred_region
      %s31 = ssub.s32 64, 64
      %32 = vsyncadd [#allocation7], %s31
      %s34 = sshll.u32 [#allocation6], 4
      %s35 = int_to_ptr.vmem [resolvable:$true] %s34
      %37 = dma.hbm_to_vmem [thread:$0]  %s1, 64, %s35, [#allocation7]
    $region9: #{tpu_custom_call.1} parent=1 // pred_fallthru
      _
    // Predicated region
    $region10: #{tpu_custom_call.1} parent=1 // pred_check
      _
    $region11: #{tpu_custom_call.1} parent=1 // pred_check_branch
      %39 = sbr.rel (0) target = $region13
    $region12: #{tpu_custom_call.1} parent=1 // pred_region
      _
    $region13: #{tpu_custom_call.1} parent=1 // pred_fallthru
      _
    // Predicated region
    $region14: #{tpu_custom_call.1} parent=1 // pred_check
      _
    $region15: #{tpu_custom_call.1} parent=1 // pred_check_branch
      %41 = sbr.rel (0) target = $region17
    $region16: #{tpu_custom_call.1} parent=1 // pred_region
      %s43 = ssub.s32 256, 256
      %44 = vsyncadd [#allocation7], %s43
      %s46 = sshll.u32 [#allocation8], 4
      %s47 = int_to_ptr.vmem [resolvable:$true] %s46
      %49 = dma.hbm_to_vmem [thread:$0]  %s3, 256, %s47, [#allocation7]
    $region17: #{tpu_custom_call.1} parent=1 // pred_fallthru
      _
    // Predicated region
    $region18: #{tpu_custom_call.1} parent=1 // pred_check
      _
    $region19: #{tpu_custom_call.1} parent=1 // pred_check_branch
      %51 = sbr.rel (0) target = $region21
    $region20: #{tpu_custom_call.1} parent=1 // pred_region
      _
    $region21: #{tpu_custom_call.1} parent=1 // pred_fallthru
      _
    // Predicated region
    $region22: #{tpu_custom_call.1} parent=1 // pred_check
      _
    $region23: #{tpu_custom_call.1} parent=1 // pred_check_branch
      %53 = sbr.rel (0) target = $region25
    $region24: #{tpu_custom_call.1} parent=1 // pred_region
      %s55 = ssub.s32 16, 16
      %56 = vsyncadd [#allocation5], %s55
      %s58 = sshll.u32 %s5, 4
      %s59 = int_to_ptr.vmem [resolvable:$true] %s58
      %61 = dma.vmem_to_smem %s59, 16, [#allocation9], [#allocation5]
    $region25: #{tpu_custom_call.1} parent=1 // pred_fallthru
      _
    // Predicated region
    $region26: #{tpu_custom_call.1} parent=1 // pred_check
      _
    $region27: #{tpu_custom_call.1} parent=1 // pred_check_branch
      %63 = sbr.rel (0) target = $region29
    $region28: #{tpu_custom_call.1} parent=1 // pred_region
      %64 = dma.done [#allocation3], 32
    $region29: #{tpu_custom_call.1} parent=1 // pred_fallthru
      _
    // Predicated region
    $region30: #{tpu_custom_call.1} parent=1 // pred_check
      _
    $region31: #{tpu_custom_call.1} parent=1 // pred_check_branch
      %66 = sbr.rel (0) target = $region33
    $region32: #{tpu_custom_call.1} parent=1 // pred_region
      %67 = dma.done [#allocation7], 64
    $region33: #{tpu_custom_call.1} parent=1 // pred_fallthru
      _
    // Predicated region
    $region34: #{tpu_custom_call.1} parent=1 // pred_check
      _
    $region35: #{tpu_custom_call.1} parent=1 // pred_check_branch
      %69 = sbr.rel (0) target = $region37
    $region36: #{tpu_custom_call.1} parent=1 // pred_region
      %70 = dma.done [#allocation7], 256
    $region37: #{tpu_custom_call.1} parent=1 // pred_fallthru
      _
    // Predicated region
    $region38: #{tpu_custom_call.1} parent=1 // pred_check
      _
    $region39: #{tpu_custom_call.1} parent=1 // pred_check_branch
      %72 = sbr.rel (0) target = $region41
    $region40: #{tpu_custom_call.1} parent=1 // pred_region
      %73 = dma.done [#allocation5], 16
    $region41: #{tpu_custom_call.1} parent=1 // pred_fallthru
      _
    %74 = sfence
    %v75 = vld [vmem:[#allocation2] sm:$0x3]
    %v76 = vld [vmem:[#allocation6] sm:$0x7]
    %v77 = vld [vmem:[%s2] sm:$0x1]
    %79 = vset.pattern.permute.xlu0 0
    %80 = vperm.xlu0 %79, %v75
    %v81 = vpop.permute.xlu0 %80
    %v83 = vlaneseq
    %v84 = vshrl.u32 %v83, 7
    %v85 = vsub.s32 0, %v84
    %v86 = vrot.slane %v76, %v85
    %v87 = vmul.f32 %v81, %v86
    %v89 = vlaneseq
    %v90 = vshrl.u32 %v89, 7
    %v91 = vsub.s32 0, %v90
    %v92 = vrot.slane %v77, %v91
    %v94 = vadd.f32 %v92, %v87
    %95 = vset.pattern.permute.xlu0 1
    %96 = vperm.xlu0 %95, %v75
    %v97 = vpop.permute.xlu0 %96
    %v99 = vlaneseq
    %v100 = vshrl.u32 %v99, 7
    %v101 = vsub.s32 1, %v100
    %v102 = vrot.slane %v76, %v101
    %v103 = vmul.f32 %v97, %v102
    %v104 = vadd.f32 %v94, %v103
    %105 = vset.pattern.permute.xlu0 2
    %106 = vperm.xlu0 %105, %v75
    %v107 = vpop.permute.xlu0 %106
    %v109 = vlaneseq
    %v110 = vshrl.u32 %v109, 7
    %v111 = vsub.s32 2, %v110
    %v112 = vrot.slane %v76, %v111
    %v113 = vmul.f32 %v107, %v112
    %v114 = vadd.f32 %v104, %v113
    %v115 = vmax.f32 %v114, 0.0
    %116 = vst [vmem:[#allocation10] sm:$0x3] %v115
    %v117 = vld [vmem:[#allocation8] sm:$0x3f]
    %v118 = vld [vmem:[#allocation8 + $0x8] sm:$0x3f]
    %v119 = vld [vmem:[%s4] sm:$0x3f]
    %121 = vset.pattern.permute.xlu0 0
    %122 = vperm.xlu0 %121, %v119
    %v123 = vpop.permute.xlu0 %122
    %v125 = vmul.f32 %v117, %v123
    %v126 = vmul.f32 %v118, %v123
    %127 = vset.pattern.permute.xlu0 1
    %128 = vperm.xlu0 %127, %v119
    %v129 = vpop.permute.xlu0 %128
    %v131 = vmul.f32 %v117, %v129
    %v132 = vmul.f32 %v118, %v129
    %133 = vset.pattern.permute.xlu0 2
    %134 = vperm.xlu0 %133, %v119
    %v135 = vpop.permute.xlu0 %134
    %v137 = vmul.f32 %v117, %v135
    %v138 = vmul.f32 %v118, %v135
    %139 = vrot.lane.b32.xlu0 %v117, 127
    %v140 = vpop.permute.xlu0 %139
    %141 = vrot.lane.b32.xlu0 %v118, 127
    %v142 = vpop.permute.xlu0 %141
    %v143 = vlaneseq
    %v144 = vand.u32 %v143, 127
    %vm145 = vcmp.lt.s32.totalorder %v144, 127
    %v146 = vsel %vm145, %v140, %v142
    %v147 = vsel %vm145, %v142, %v140
    %148 = vset.pattern.permute.xlu0 3
    %149 = vperm.xlu0 %148, %v119
    %v150 = vpop.permute.xlu0 %149
    %v152 = vmul.f32 %v146, %v150
    %v153 = vmul.f32 %v147, %v150
    %v154 = vadd.f32 %v125, %v152
    %v155 = vadd.f32 %v126, %v153
    %156 = vset.pattern.permute.xlu0 4
    %157 = vperm.xlu0 %156, %v119
    %v158 = vpop.permute.xlu0 %157
    %v160 = vmul.f32 %v146, %v158
    %v161 = vmul.f32 %v147, %v158
    %v162 = vadd.f32 %v131, %v160
    %v163 = vadd.f32 %v132, %v161
    %164 = vset.pattern.permute.xlu0 5
    %165 = vperm.xlu0 %164, %v119
    %v166 = vpop.permute.xlu0 %165
    %v168 = vmul.f32 %v146, %v166
    %v169 = vmul.f32 %v147, %v166
    %v170 = vadd.f32 %v137, %v168
    %v171 = vadd.f32 %v138, %v169
    %172 = vrot.lane.b32.xlu0 %v117, 126
    %v173 = vpop.permute.xlu0 %172
    %174 = vrot.lane.b32.xlu0 %v118, 126
    %v175 = vpop.permute.xlu0 %174
    %vm176 = vcmp.lt.s32.totalorder %v144, 126
    %v177 = vsel %vm176, %v173, %v175
    %v178 = vsel %vm176, %v175, %v173
    %179 = vset.pattern.permute.xlu0 6
    %180 = vperm.xlu0 %179, %v119
    %v181 = vpop.permute.xlu0 %180
    %v183 = vmul.f32 %v177, %v181
    %v184 = vmul.f32 %v178, %v181
    %v185 = vadd.f32 %v154, %v183
    %v186 = vadd.f32 %v155, %v184
    %187 = vset.pattern.permute.xlu0 7
    %188 = vperm.xlu0 %187, %v119
    %v189 = vpop.permute.xlu0 %188
    %v191 = vmul.f32 %v177, %v189
    %v192 = vmul.f32 %v178, %v189
    %v193 = vadd.f32 %v162, %v191
    %v194 = vadd.f32 %v163, %v192
    %195 = vset.pattern.permute.xlu0 8
    %196 = vperm.xlu0 %195, %v119
    %v197 = vpop.permute.xlu0 %196
    %v199 = vmul.f32 %v177, %v197
    %v200 = vmul.f32 %v178, %v197
    %v201 = vadd.f32 %v170, %v199
    %v202 = vadd.f32 %v171, %v200
    %203 = vrot.lane.b32.xlu0 %v117, 112
    %v204 = vpop.permute.xlu0 %203
    %205 = vrot.lane.b32.xlu0 %v118, 112
    %v206 = vpop.permute.xlu0 %205
    %vm207 = vcmp.lt.s32.totalorder %v144, 112
    %v208 = vsel %vm207, %v204, %v206
    %v209 = vsel %vm207, %v206, %v204
    %210 = vset.pattern.permute.xlu0 9
    %211 = vperm.xlu0 %210, %v119
    %v212 = vpop.permute.xlu0 %211
    %v214 = vmul.f32 %v208, %v212
    %v215 = vmul.f32 %v209, %v212
    %v216 = vadd.f32 %v185, %v214
    %v217 = vadd.f32 %v186, %v215
    %218 = vset.pattern.permute.xlu0 10
    %219 = vperm.xlu0 %218, %v119
    %v220 = vpop.permute.xlu0 %219
    %v222 = vmul.f32 %v208, %v220
    %v223 = vmul.f32 %v209, %v220
    %v224 = vadd.f32 %v193, %v222
    %v225 = vadd.f32 %v194, %v223
    %226 = vset.pattern.permute.xlu0 11
    %227 = vperm.xlu0 %226, %v119
    %v228 = vpop.permute.xlu0 %227
    %v230 = vmul.f32 %v208, %v228
    %v231 = vmul.f32 %v209, %v228
    %v232 = vadd.f32 %v201, %v230
    %v233 = vadd.f32 %v202, %v231
    %234 = vrot.lane.b32.xlu0 %v117, 111
    %v235 = vpop.permute.xlu0 %234
    %236 = vrot.lane.b32.xlu0 %v118, 111
    %v237 = vpop.permute.xlu0 %236
    %vm238 = vcmp.lt.s32.totalorder %v144, 111
    %v239 = vsel %vm238, %v235, %v237
    %v240 = vsel %vm238, %v237, %v235
    %241 = vset.pattern.permute.xlu0 12
    %242 = vperm.xlu0 %241, %v119
    %v243 = vpop.permute.xlu0 %242
    %v245 = vmul.f32 %v239, %v243
    %v246 = vmul.f32 %v240, %v243
    %v247 = vadd.f32 %v216, %v245
    %v248 = vadd.f32 %v217, %v246
    %249 = vset.pattern.permute.xlu0 13
    %250 = vperm.xlu0 %249, %v119
    %v251 = vpop.permute.xlu0 %250
    %v253 = vmul.f32 %v239, %v251
    %v254 = vmul.f32 %v240, %v251
    %v255 = vadd.f32 %v224, %v253
    %v256 = vadd.f32 %v225, %v254
    %257 = vset.pattern.permute.xlu0 14
    %258 = vperm.xlu0 %257, %v119
    %v259 = vpop.permute.xlu0 %258
    %v261 = vmul.f32 %v239, %v259
    %v262 = vmul.f32 %v240, %v259
    %v263 = vadd.f32 %v232, %v261
    %v264 = vadd.f32 %v233, %v262
    %265 = vrot.lane.b32.xlu0 %v117, 110
    %v266 = vpop.permute.xlu0 %265
    %267 = vrot.lane.b32.xlu0 %v118, 110
    %v268 = vpop.permute.xlu0 %267
    %vm269 = vcmp.lt.s32.totalorder %v144, 110
    %v270 = vsel %vm269, %v266, %v268
    %v271 = vsel %vm269, %v268, %v266
    %272 = vset.pattern.permute.xlu0 15
    %273 = vperm.xlu0 %272, %v119
    %v274 = vpop.permute.xlu0 %273
    %v276 = vmul.f32 %v270, %v274
    %v277 = vmul.f32 %v271, %v274
    %v278 = vadd.f32 %v247, %v276
    %v279 = vadd.f32 %v248, %v277
    %280 = vset.pattern.permute.xlu0 16
    %281 = vperm.xlu0 %280, %v119
    %v282 = vpop.permute.xlu0 %281
    %v284 = vmul.f32 %v270, %v282
    %v285 = vmul.f32 %v271, %v282
    %v286 = vadd.f32 %v255, %v284
    %v287 = vadd.f32 %v256, %v285
    %288 = vset.pattern.permute.xlu0 17
    %289 = vperm.xlu0 %288, %v119
    %v290 = vpop.permute.xlu0 %289
    %v292 = vmul.f32 %v270, %v290
    %v293 = vmul.f32 %v271, %v290
    %v294 = vadd.f32 %v263, %v292
    %v295 = vadd.f32 %v264, %v293
    %296 = vrot.lane.b32.xlu0 %v117, 96
    %v297 = vpop.permute.xlu0 %296
    %298 = vrot.lane.b32.xlu0 %v118, 96
    %v299 = vpop.permute.xlu0 %298
    %vm300 = vcmp.lt.s32.totalorder %v144, 96
    %v301 = vsel %vm300, %v297, %v299
    %v302 = vsel %vm300, %v299, %v297
    %303 = vset.pattern.permute.xlu0 18
    %304 = vperm.xlu0 %303, %v119
    %v305 = vpop.permute.xlu0 %304
    %v307 = vmul.f32 %v301, %v305
    %v308 = vmul.f32 %v302, %v305
    %v309 = vadd.f32 %v278, %v307
    %v310 = vadd.f32 %v279, %v308
    %311 = vset.pattern.permute.xlu0 19
    %312 = vperm.xlu0 %311, %v119
    %v313 = vpop.permute.xlu0 %312
    %v315 = vmul.f32 %v301, %v313
    %v316 = vmul.f32 %v302, %v313
    %v317 = vadd.f32 %v286, %v315
    %v318 = vadd.f32 %v287, %v316
    %319 = vset.pattern.permute.xlu0 20
    %320 = vperm.xlu0 %319, %v119
    %v321 = vpop.permute.xlu0 %320
    %v323 = vmul.f32 %v301, %v321
    %v324 = vmul.f32 %v302, %v321
    %v325 = vadd.f32 %v294, %v323
    %v326 = vadd.f32 %v295, %v324
    %327 = vrot.lane.b32.xlu0 %v117, 95
    %v328 = vpop.permute.xlu0 %327
    %329 = vrot.lane.b32.xlu0 %v118, 95
    %v330 = vpop.permute.xlu0 %329
    %vm331 = vcmp.lt.s32.totalorder %v144, 95
    %v332 = vsel %vm331, %v328, %v330
    %v333 = vsel %vm331, %v330, %v328
    %334 = vset.pattern.permute.xlu0 21
    %335 = vperm.xlu0 %334, %v119
    %v336 = vpop.permute.xlu0 %335
    %v338 = vmul.f32 %v332, %v336
    %v339 = vmul.f32 %v333, %v336
    %v340 = vadd.f32 %v309, %v338
    %v341 = vadd.f32 %v310, %v339
    %342 = vset.pattern.permute.xlu0 22
    %343 = vperm.xlu0 %342, %v119
    %v344 = vpop.permute.xlu0 %343
    %v346 = vmul.f32 %v332, %v344
    %v347 = vmul.f32 %v333, %v344
    %v348 = vadd.f32 %v317, %v346
    %v349 = vadd.f32 %v318, %v347
    %350 = vset.pattern.permute.xlu0 23
    %351 = vperm.xlu0 %350, %v119
    %v352 = vpop.permute.xlu0 %351
    %v354 = vmul.f32 %v332, %v352
    %v355 = vmul.f32 %v333, %v352
    %v356 = vadd.f32 %v325, %v354
    %v357 = vadd.f32 %v326, %v355
    %358 = vrot.lane.b32.xlu0 %v117, 94
    %v359 = vpop.permute.xlu0 %358
    %360 = vrot.lane.b32.xlu0 %v118, 94
    %v361 = vpop.permute.xlu0 %360
    %vm362 = vcmp.lt.s32.totalorder %v144, 94
    %v363 = vsel %vm362, %v359, %v361
    %v364 = vsel %vm362, %v361, %v359
    %365 = vset.pattern.permute.xlu0 24
    %366 = vperm.xlu0 %365, %v119
    %v367 = vpop.permute.xlu0 %366
    %v369 = vmul.f32 %v363, %v367
    %v370 = vmul.f32 %v364, %v367
    %v371 = vadd.f32 %v340, %v369
    %v372 = vadd.f32 %v341, %v370
    %373 = vset.pattern.permute.xlu0 25
    %374 = vperm.xlu0 %373, %v119
    %v375 = vpop.permute.xlu0 %374
    %v377 = vmul.f32 %v363, %v375
    %v378 = vmul.f32 %v364, %v375
    %v379 = vadd.f32 %v348, %v377
    %v380 = vadd.f32 %v349, %v378
    %381 = vset.pattern.permute.xlu0 26
    %382 = vperm.xlu0 %381, %v119
    %v383 = vpop.permute.xlu0 %382
    %v385 = vmul.f32 %v363, %v383
    %v386 = vmul.f32 %v364, %v383
    %v387 = vadd.f32 %v356, %v385
    %v388 = vadd.f32 %v357, %v386
    %s389 = sld [smem:[#allocation9]]
    %v392 = vrot.slane %v371, 1
    %v393 = vrot.slane %v372, 1
    %v396 = vadd.f32 %v371, %v392
    %v397 = vadd.f32 %v372, %v393
    %v398 = vrot.slane %v371, 2
    %v399 = vrot.slane %v372, 2
    %v402 = vadd.f32 %v396, %v398
    %v403 = vadd.f32 %v397, %v399
    %v404 = vstv %s389
    %v405 = vadd.f32 %v402, %v404
    %v406 = vadd.f32 %v403, %v404
    %v407 = vmax.f32 %v405, 0.0
    %v408 = vmax.f32 %v406, 0.0
    %v411 = vcombine.low %v407, %v408
    %v413 = vunpack.c.l.s4 1966171168
    %v414 = vunpack.c.0.s8 %v413
    %v415 = vlaneseq
    %v416 = vshrl.u32 %v415, 7
    %v417 = vsub.s32 %v414, %v416
    %v418 = vrot.slane %v411, %v417
    %v420 = vunpack.c.l.s4 1966171168
    %v421 = vunpack.c.0.s8 %v420
    %v422 = vlaneseq
    %v423 = vshrl.u32 %v422, 7
    %v424 = vsub.s32 %v421, %v423
    %v425 = vrot.slane %v418, %v424
    %v427 = vlaneseq
    %vm428 = vcmp.ge.s32.totalorder %v427, 0
    %vm429 = vcmp.lt.s32.totalorder %v427, 256
    %vm430 = vmand %vm428, %vm429
    %431 = vst.msk [vmem:[#allocation11] ss:$8 sm:$0x3] %vm430, %v425
    %432 = vst.msk [vmem:[#allocation11] ss:$8 sm:$0x0] %vm430, %v425
    %v433 = vcombine.high %v418, %v418
    %v435 = vunpack.c.l.s4 1966171168
    %v436 = vunpack.c.0.s8 %v435
    %v437 = vlaneseq
    %v438 = vshrl.u32 %v437, 7
    %v439 = vsub.s32 %v436, %v438
    %v440 = vrot.slane %v433, %v439
    %v441 = vcombine.high %v440, %v440
    %s443 = scalar_lea.vmem [#allocation11], 3
    %444 = vst.msk [vmem:[%s443] ss:$8 sm:$0x3] %vm430, %v441
    %445 = vst.msk [vmem:[%s443] ss:$8 sm:$0x0] %vm430, %v441
    %s446 = sld [smem:[#allocation9 + $0x1]]
    %v449 = vrot.slane %v379, 1
    %v450 = vrot.slane %v380, 1
    %v453 = vadd.f32 %v379, %v449
    %v454 = vadd.f32 %v380, %v450
    %v455 = vrot.slane %v379, 2
    %v456 = vrot.slane %v380, 2
    %v459 = vadd.f32 %v453, %v455
    %v460 = vadd.f32 %v454, %v456
    %v461 = vstv %s446
    %v462 = vadd.f32 %v459, %v461
    %v463 = vadd.f32 %v460, %v461
    %v464 = vmax.f32 %v462, 0.0
    %v465 = vmax.f32 %v463, 0.0
    %v468 = vcombine.low %v464, %v465
    %v470 = vunpack.c.l.s4 1966171168
    %v471 = vunpack.c.0.s8 %v470
    %v472 = vlaneseq
    %v473 = vshrl.u32 %v472, 7
    %v474 = vsub.s32 %v471, %v473
    %v475 = vrot.slane %v468, %v474
    %v477 = vunpack.c.l.s4 1966171168
    %v478 = vunpack.c.0.s8 %v477
    %v479 = vlaneseq
    %v480 = vshrl.u32 %v479, 7
    %v481 = vsub.s32 %v478, %v480
    %v482 = vrot.slane %v475, %v481
    %s484 = scalar_lea.vmem [#allocation11], 1
    %485 = vst.msk [vmem:[%s484] ss:$8 sm:$0x3] %vm430, %v482
    %486 = vst.msk [vmem:[%s484] ss:$8 sm:$0x0] %vm430, %v482
    %v487 = vcombine.high %v475, %v475
    %v489 = vunpack.c.l.s4 1966171168
    %v490 = vunpack.c.0.s8 %v489
    %v491 = vlaneseq
    %v492 = vshrl.u32 %v491, 7
    %v493 = vsub.s32 %v490, %v492
    %v494 = vrot.slane %v487, %v493
    %v495 = vcombine.high %v494, %v494
    %s497 = scalar_lea.vmem [#allocation11], 4
    %498 = vst.msk [vmem:[%s497] ss:$8 sm:$0x3] %vm430, %v495
    %499 = vst.msk [vmem:[%s497] ss:$8 sm:$0x0] %vm430, %v495
    %s500 = sld [smem:[#allocation9 + $0x2]]
    %v503 = vrot.slane %v387, 1
    %v504 = vrot.slane %v388, 1
    %v507 = vadd.f32 %v387, %v503
    %v508 = vadd.f32 %v388, %v504
    %v509 = vrot.slane %v387, 2
    %v510 = vrot.slane %v388, 2
    %v513 = vadd.f32 %v507, %v509
    %v514 = vadd.f32 %v508, %v510
    %v515 = vstv %s500
    %v516 = vadd.f32 %v513, %v515
    %v517 = vadd.f32 %v514, %v515
    %v518 = vmax.f32 %v516, 0.0
    %v519 = vmax.f32 %v517, 0.0
    %v522 = vcombine.low %v518, %v519
    %v524 = vunpack.c.l.s4 1966171168
    %v525 = vunpack.c.0.s8 %v524
    %v526 = vlaneseq
    %v527 = vshrl.u32 %v526, 7
    %v528 = vsub.s32 %v525, %v527
    %v529 = vrot.slane %v522, %v528
    %v531 = vunpack.c.l.s4 1966171168
    %v532 = vunpack.c.0.s8 %v531
    %v533 = vlaneseq
    %v534 = vshrl.u32 %v533, 7
    %v535 = vsub.s32 %v532, %v534
    %v536 = vrot.slane %v529, %v535
    %s538 = scalar_lea.vmem [#allocation11], 2
    %539 = vst.msk [vmem:[%s538] ss:$8 sm:$0x3] %vm430, %v536
    %540 = vst.msk [vmem:[%s538] ss:$8 sm:$0x0] %vm430, %v536
    %v541 = vcombine.high %v529, %v529
    %v543 = vunpack.c.l.s4 1966171168
    %v544 = vunpack.c.0.s8 %v543
    %v545 = vlaneseq
    %v546 = vshrl.u32 %v545, 7
    %v547 = vsub.s32 %v544, %v546
    %v548 = vrot.slane %v541, %v547
    %v549 = vcombine.high %v548, %v548
    %s551 = scalar_lea.vmem [#allocation11], 5
    %552 = vst.msk [vmem:[%s551] ss:$8 sm:$0x3] %vm430, %v549
    %553 = vst.msk [vmem:[%s551] ss:$8 sm:$0x0] %vm430, %v549
    // Predicated region
    $region42: #{tpu_custom_call.1} parent=1 // pred_check
      _
    $region43: #{tpu_custom_call.1} parent=1 // pred_check_branch
      %555 = sbr.rel (0) target = $region45
    $region44: #{tpu_custom_call.1} parent=1 // pred_region
      %s557 = ssub.s32 32, 32
      %558 = vsyncadd [#allocation4], %s557
      %s560 = sshll.u32 [#allocation10], 4
      %s561 = int_to_ptr.vmem [resolvable:$true] %s560
      %563 = dma.vmem_to_hbm [thread:$0]  %s561, 32, %s6, [#allocation4]
    $region45: #{tpu_custom_call.1} parent=1 // pred_fallthru
      _
    // Predicated region
    $region46: #{tpu_custom_call.1} parent=1 // pred_check
      _
    $region47: #{tpu_custom_call.1} parent=1 // pred_check_branch
      %565 = sbr.rel (0) target = $region49
    $region48: #{tpu_custom_call.1} parent=1 // pred_region
      %s567 = ssub.s32 256, 256
      %568 = vsyncadd [#allocation12], %s567
      %s570 = sshll.u32 [#allocation11], 4
      %s571 = int_to_ptr.vmem [resolvable:$true] %s570
      %573 = dma.vmem_to_hbm [thread:$0]  %s571, 256, %s7, [#allocation12]
    $region49: #{tpu_custom_call.1} parent=1 // pred_fallthru
      _
    // Predicated region
    $region50: #{tpu_custom_call.1} parent=1 // pred_check
      _
    $region51: #{tpu_custom_call.1} parent=1 // pred_check_branch
      %575 = sbr.rel (0) target = $region53
    $region52: #{tpu_custom_call.1} parent=1 // pred_region
      %576 = dma.done [#allocation4], 32
    $region53: #{tpu_custom_call.1} parent=1 // pred_fallthru
      _
    // Predicated region
    $region54: #{tpu_custom_call.1} parent=1 // pred_check
      _
    $region55: #{tpu_custom_call.1} parent=1 // pred_check_branch
      %578 = sbr.rel (0) target = $region57
    $region56: #{tpu_custom_call.1} parent=1 // pred_region
      %579 = dma.done [#allocation12], 256
    $region57: #{tpu_custom_call.1} parent=1 // pred_fallthru
      _
    %580 = vsyncpa [#allocation3], 1
    %581 = vsyncpa [#allocation7], 1
    %582 = vsyncpa [#allocation4], 1
    %583 = vsyncpa [#allocation12], 1
    %584 = vsyncpa [#allocation5], 1

</llo_original>
